<compile_context>
chip_gen: v7x
topology: tpu7x:2x2x1
jax: 0.10.0
libtpu: 0.0.40
codegen_flags: <defaults>
</compile_context>

<pallas_src>
import math

import jax
import jax.numpy as jnp
from jax.experimental import pallas as pl
from jax.experimental.pallas import tpu as pltpu

TAU = 0.25
ALPHA = 0.5
LN_EPS = 1e-5          # torch.nn.LayerNorm default eps
STABILIZER = 1e-6      # numerical_stabilizer in softmax_kernel_transformation
NUM_FEATURES = 10      # m in create_projection_matrix(10, dim)


# ---------------------------------------------------------------------------
# Fused Pallas kernel: fc0 + LayerNorm + ReLU + num_layers * TransConvLayer
# ---------------------------------------------------------------------------
def _layer_norm(y, g, b):
    # one-pass statistics: mean(y) and mean(y^2) are independent reductions,
    # so the two XLU cross-lane reduces don't serialize.
    mu = jnp.mean(y, axis=-1, keepdims=True)
    ms = jnp.mean(y * y, axis=-1, keepdims=True)
    var = jnp.maximum(ms - mu * mu, 0.0)
    return (y - mu) * jax.lax.rsqrt(var + LN_EPS) * g + b


def _make_fused_kernel(num_layers, hid):
    """Kernel refs:
         x_ref    [N, hid]                       bf16 (input, channel-padded to hid)
         w_ref    [num_layers+1, hid, 3*hid+2M]  bf16 (slab 0 = fc0, slab 1+li = layer li)
         vecs_ref [3+3*num_layers, 3*hid+2M]     f32  (bias / LayerNorm rows)
         o_ref    [N, hid]                       f32
    """
    d = hid
    m = NUM_FEATURES

    def kernel(x_ref, w_ref, vecs_ref, o_ref):
        # --- input projection + LayerNorm + ReLU (dropout = identity, eval) ---
        fc0_b = vecs_ref[0:1, :d]
        ln0_g = vecs_ref[1:2, :d]
        ln0_b = vecs_ref[2:3, :d]
        h = jnp.dot(x_ref[...], w_ref[0],
                    preferred_element_type=jnp.float32)[:, :d] + fc0_b       # [N, d]
        x = jnp.maximum(_layer_norm(h, ln0_g, ln0_b), 0.0)                   # [N, d] f32

        # --- TransConv layers (unrolled; x never leaves the chip) ---
        for li in range(num_layers):
            w = w_ref[1 + li]                                                # [d, 3d+2m] bf16
            r0 = 3 + 3 * li
            bqkv = vecs_ref[r0:r0 + 1, :]                                    # [1, 3d+2m]
            ln_g = vecs_ref[r0 + 1:r0 + 2, :d]
            ln_b = vecs_ref[r0 + 2:r0 + 3, :d]

            # single fused matmul producing q, k, v AND the projected q/k
            # features (projT folded into the weight at host prep; tau/d scale
            # folded into the q/k columns).  Width 3d+2m = 116 < 128 lanes.
            qkv = jnp.dot(x.astype(jnp.bfloat16), w,
                          preferred_element_type=jnp.float32) + bqkv          # [N, 3d+2m]
            qn = qkv[:, :d]
            kn = qkv[:, d:2 * d]
            v = qkv[:, 2 * d:3 * d]
            qp = qkv[:, 3 * d:3 * d + m]
            kp = qkv[:, 3 * d + m:3 * d + 2 * m]

            diag_q = 0.5 * jnp.sum(qn * qn, axis=-1, keepdims=True)          # [N, 1]
            diag_k = 0.5 * jnp.sum(kn * kn, axis=-1, keepdims=True)          # [N, 1]

            # queries: per-row max over random features; keys: global max.
            # ratio = 1/sqrt(M) is dropped — it cancels in z_num / z_den.
            q_prime = jnp.exp(qp - diag_q
                              - jnp.max(qp, axis=-1, keepdims=True)) + STABILIZER
            k_prime = jnp.exp(kp - diag_k - jnp.max(kp)) + STABILIZER        # [N, m]

            # numerator: kvs[m, d] = sum_n k'[n, m] * v[n, d]; z_num = q' @ kvs
            # (contracting the node axis; tiny at N=8 — for large N this becomes
            # a blockwise-accumulated pass over node tiles, see TODO below)
            kvs = jax.lax.dot_general(k_prime, v, (((0,), (0,)), ((), ())),
                                      preferred_element_type=jnp.float32)    # [m, d]
            z_num = jnp.dot(q_prime, kvs,
                            preferred_element_type=jnp.float32)              # [N, d]
            # denominator: z_den[n] = sum_m q'[n, m] * (sum_n' k'[n', m])
            ks_sum = jnp.sum(k_prime, axis=0, keepdims=True)                 # [1, m]
            z_den = jnp.sum(q_prime * ks_sum, axis=-1, keepdims=True)        # [N, 1]

            # EUP approx reciprocal + one Newton step -> exact-divide parity
            r = pl.reciprocal(z_den, approx=True)
            r = r * (2.0 - z_den * r)
            attn = z_num * r                                                 # [N, d]

            # residual mix + LayerNorm (head-mean is identity for H=1)
            y = ALPHA * attn + (1.0 - ALPHA) * x
            x = _layer_norm(y, ln_g, ln_b)

        o_ref[...] = x

    return kernel


def transconv_forward(x, kparams):
    """Single fused pallas_call over the whole TransConv forward pass."""
    n, in_c = x.shape
    w_all, vecs = kparams["w_all"], kparams["vecs"]
    hid = (vecs.shape[1] - 2 * NUM_FEATURES) // 3
    num_layers = w_all.shape[0] - 1

    # zero-pad input channels to hid (fc0 weight rows beyond in_c are zero),
    # cast the MXU-side activation to bf16.
    x_pad = jnp.pad(x, ((0, 0), (0, hid - in_c))).astype(jnp.bfloat16)

    # Total working set is ~20 KB -> whole problem lives in VMEM, no grid.
    # TODO(synk): for production-size N, tile the node axis with a two-pass grid
    # (pass 1 accumulates kvs/ks_sum/global-k-max into VMEM scratch with a
    # trailing "arbitrary" reduction axis, pass 2 applies q' on a "parallel"
    # axis so v7x's 2nd TensorCore is used), 512-1024-row tiles, Buffered(2-3),
    # raise vmem_limit_bytes, and pad HID / segment starts to 128-lane multiples
    # for unmasked vst and whole-vreg slices.
    return pl.pallas_call(
        _make_fused_kernel(num_layers, hid),
        out_shape=jax.ShapeDtypeStruct((n, hid), jnp.float32),
        in_specs=[pl.BlockSpec(memory_space=pltpu.MemorySpace.VMEM)] * 3,
        out_specs=pl.BlockSpec(memory_space=pltpu.MemorySpace.VMEM),
    )(x_pad, w_all, vecs)


# ---------------------------------------------------------------------------
# Deterministic parameter construction (PyTorch-style layout) + kernel prep
# ---------------------------------------------------------------------------
def create_projection_matrix(key, m, d):
    """Random orthogonal-feature projection, m x d (scaling == 0)."""
    nb_full_blocks = m // d
    keys = jax.random.split(key, nb_full_blocks + 2)
    blocks = []
    for i in range(nb_full_blocks):
        blk = jax.random.normal(keys[i], (d, d), dtype=jnp.float32)
        qmat, _ = jnp.linalg.qr(blk)
        blocks.append(qmat.T)
    rem = m - nb_full_blocks * d
    if rem > 0:
        blk = jax.random.normal(keys[nb_full_blocks], (d, d), dtype=jnp.float32)
        qmat, _ = jnp.linalg.qr(blk)
        blocks.append(qmat.T[:rem])
    final = jnp.concatenate(blocks, axis=0)                                   # [m, d]
    multiplier = jnp.linalg.norm(
        jax.random.normal(keys[-1], (m, d), dtype=jnp.float32), axis=1)
    return multiplier[:, None] * final


def init_params(key, in_channels, hidden, num_layers, num_heads=1):
    assert num_heads == 1, "kernel implements the default num_heads=1 configuration"
    keys = jax.random.split(key, 1 + num_layers)

    def linear(k, fan_in, fan_out):
        # weights stored [in, out] (transpose of torch nn.Linear's [out, in])
        kw, kb = jax.random.split(k)
        bound = 1.0 / math.sqrt(fan_in)
        w = jax.random.uniform(kw, (fan_in, fan_out), jnp.float32, -bound, bound)
        b = jax.random.uniform(kb, (1, fan_out), jnp.float32, -bound, bound)
        return w, b

    fc0_w, fc0_b = linear(keys[0], in_channels, hidden)
    params = {
        "fc0_w": fc0_w, "fc0_b": fc0_b,
        "ln0_g": jnp.ones((1, hidden), jnp.float32),
        "ln0_b": jnp.zeros((1, hidden), jnp.float32),
        "layers": [],
    }
    # TODO(synk): the PyTorch module seeds the projection matrix from torch's RNG with a
    # data-dependent seed (ceil(|sum(query)|*1e8)); torch's RNG/QR stream cannot be
    # reproduced in JAX, so an equivalent random-feature matrix is built deterministically
    # per layer from PRNGKey(0).
    for i in range(num_layers):
        kq, kk, kv, kproj = jax.random.split(keys[1 + i], 4)
        wq, bq = linear(kq, hidden, hidden * num_heads)
        wk, bk = linear(kk, hidden, hidden * num_heads)
        wv, bv = linear(kv, hidden, hidden * num_heads)
        proj = create_projection_matrix(kproj, NUM_FEATURES, hidden)          # [M, hidden]
        params["layers"].append({
            "wq": wq, "bq": bq, "wk": wk, "bk": bk, "wv": wv, "bv": bv,
            "projT": proj.T,        # [hidden, M]
            "ln_g": jnp.ones((1, hidden), jnp.float32),
            "ln_b": jnp.zeros((1, hidden), jnp.float32),
        })
    return params


def prepare_kernel_params(params):
    """One-time host-side transform to the fused kernel layout.

    - fold scale = tau^-0.5 * d^-0.25 into the q/k weight and bias columns (f32)
    - fold the random-feature projection: extra columns (Wq*s)@projT, (Wk*s)@projT
      and bias columns (bq*s)@projT, (bk*s)@projT  ->  one [D, 3D+2M] weight/layer
    - pack fc0_w + all layer weights into ONE bf16 [L+1, D, 3D+2M] slab stack
      (folding done in f32, cast once at the end)
    - pack all bias / LayerNorm row-vectors into ONE f32 [3+3L, 3D+2M] table
    """
    hidden = params["fc0_w"].shape[1]
    in_c = params["fc0_w"].shape[0]
    assert in_c <= hidden, "fc0 slab packing assumes in_channels <= hidden"
    width = 3 * hidden + 2 * NUM_FEATURES
    scale = (1.0 / math.sqrt(TAU)) * (float(hidden) ** -0.25)

    def pad_row(v):
        return jnp.pad(v, ((0, 0), (0, width - v.shape[1])))

    # weight slabs (f32 folding, single bf16 cast at the end)
    w0 = jnp.zeros((hidden, width), jnp.float32)
    w0 = w0.at[:in_c, :hidden].set(params["fc0_w"])
    slabs = [w0]
    rows = [pad_row(params["fc0_b"]), pad_row(params["ln0_g"]), pad_row(params["ln0_b"])]
    for lp in params["layers"]:
        wq_s, wk_s = lp["wq"] * scale, lp["wk"] * scale
        bq_s, bk_s = lp["bq"] * scale, lp["bk"] * scale
        slabs.append(jnp.concatenate(
            [wq_s, wk_s, lp["wv"], wq_s @ lp["projT"], wk_s @ lp["projT"]], axis=1))
        rows.append(jnp.concatenate(
            [bq_s, bk_s, lp["bv"], bq_s @ lp["projT"], bk_s @ lp["projT"]], axis=1))
        rows.append(pad_row(lp["ln_g"]))
        rows.append(pad_row(lp["ln_b"]))

    return {
        "w_all": jnp.stack(slabs, axis=0).astype(jnp.bfloat16),   # [L+1, D, 3D+2M]
        "vecs": jnp.concatenate(rows, axis=0),                    # [3+3L, 3D+2M] f32
    }


# ---------------------------------------------------------------------------
# Plain-JAX reference (original unfused f32 math) for a sanity check
# ---------------------------------------------------------------------------
def reference_forward(x, params):
    def ln(y, g, b):
        mu = jnp.mean(y, axis=-1, keepdims=True)
        var = jnp.mean((y - mu) ** 2, axis=-1, keepdims=True)
        return (y - mu) / jnp.sqrt(var + LN_EPS) * g + b

    x = jnp.maximum(ln(x @ params["fc0_w"] + params["fc0_b"],
                       params["ln0_g"], params["ln0_b"]), 0.0)
    for lp in params["layers"]:
        q = x @ lp["wq"] + lp["bq"]
        k = x @ lp["wk"] + lp["bk"]
        v = x @ lp["wv"] + lp["bv"]
        d = q.shape[-1]
        scale = (1.0 / math.sqrt(TAU)) * (float(d) ** -0.25)
        qn, kn = q * scale, k * scale
        ratio = 1.0 / math.sqrt(float(NUM_FEATURES))
        qp, kp = qn @ lp["projT"], kn @ lp["projT"]
        dq = 0.5 * jnp.sum(qn * qn, -1, keepdims=True)
        dk = 0.5 * jnp.sum(kn * kn, -1, keepdims=True)
        qpr = ratio * (jnp.exp(qp - dq - jnp.max(qp, -1, keepdims=True)) + STABILIZER)
        kpr = ratio * (jnp.exp(kp - dk - jnp.max(kp)) + STABILIZER)
        z_num = qpr @ (kpr.T @ v)
        z_den = jnp.sum(qpr * jnp.sum(kpr, 0, keepdims=True), -1, keepdims=True)
        x = ln(ALPHA * (z_num / z_den) + (1.0 - ALPHA) * x, lp["ln_g"], lp["ln_b"])
    return x


if __name__ == "__main__":
    N, IN_C, HID, LAYERS = 8, 16, 32, 2
    key = jax.random.PRNGKey(0)
    k_x, k_p = jax.random.split(key)
    x = jax.random.normal(k_x, (N, IN_C), dtype=jnp.float32)

    params = init_params(k_p, IN_C, HID, LAYERS)          # PyTorch-style params
    kparams = prepare_kernel_params(params)               # packed/folded bf16 kernel layout

    out = jax.jit(transconv_forward)(x, kparams)
    out = jax.block_until_ready(out)

    ref = reference_forward(x, params)                    # original f32 math
    assert out.shape == (N, HID)
    assert bool(jnp.all(jnp.isfinite(out)))
    # tolerance accommodates bf16 MXU weights in the kernel vs the f32 reference
    assert bool(jnp.allclose(out, ref, atol=5e-2, rtol=5e-2)), "mismatch vs plain-JAX reference"
    print("KERNEL_OK")
</pallas_src>

<mosaic_0001>
module attributes {stable_mosaic.version = 11 : i64} {
  func.func @kernel(%arg0: memref<8x32xbf16, #tpu.memory_space<vmem>>, %arg1: memref<3x32x116xbf16, #tpu.memory_space<vmem>>, %arg2: memref<9x116xf32, #tpu.memory_space<vmem>>, %arg3: memref<8x32xf32, #tpu.memory_space<vmem>>) attributes {dimension_semantics = [], scalar_prefetch = 0 : i64, scratch_operands = 0 : i64, tpu.core_type = #tpu.core_type<tc>} {
    %c0 = arith.constant 0 : index
    %c0_0 = arith.constant 0 : index
    %0 = vector.load %arg2[%c0, %c0_0] : memref<9x116xf32, #tpu.memory_space<vmem>>, vector<1x32xf32>
    %c1 = arith.constant 1 : index
    %c0_1 = arith.constant 0 : index
    %1 = vector.load %arg2[%c1, %c0_1] : memref<9x116xf32, #tpu.memory_space<vmem>>, vector<1x32xf32>
    %c2 = arith.constant 2 : index
    %c0_2 = arith.constant 0 : index
    %2 = vector.load %arg2[%c2, %c0_2] : memref<9x116xf32, #tpu.memory_space<vmem>>, vector<1x32xf32>
    %c0_3 = arith.constant 0 : index
    %c0_4 = arith.constant 0 : index
    %3 = vector.load %arg0[%c0_3, %c0_4] : memref<8x32xbf16, #tpu.memory_space<vmem>>, vector<8x32xbf16>
    %c0_5 = arith.constant 0 : index
    %c0_6 = arith.constant 0 : index
    %c0_7 = arith.constant 0 : index
    %4 = vector.load %arg1[%c0_5, %c0_6, %c0_7] : memref<3x32x116xbf16, #tpu.memory_space<vmem>>, vector<1x32x116xbf16>
    %5 = vector.shape_cast %4 : vector<1x32x116xbf16> to vector<32x116xbf16>
    %cst = arith.constant dense<0.000000e+00> : vector<8x116xf32>
    %6 = tpu.matmul %3, %5, %cst {dimension_numbers = #tpu.dot_dimension_numbers<[1], [0], [0], [1], [0, 0, 1, 1], [], []>} : vector<8x32xbf16>, vector<32x116xbf16>, vector<8x116xf32> -> vector<8x116xf32>
    %7 = vector.extract_strided_slice %6 {offsets = [0, 0], sizes = [8, 32], strides = [1, 1]} : vector<8x116xf32> to vector<8x32xf32>
    %8 = vector.broadcast %0 : vector<1x32xf32> to vector<8x32xf32>
    %9 = arith.addf %7, %8 : vector<8x32xf32>
    %cst_8 = arith.constant dense<0.000000e+00> : vector<8xf32>
    %10 = vector.multi_reduction <add>, %9, %cst_8 [1] : vector<8x32xf32> to vector<8xf32>
    %11 = vector.shape_cast %10 : vector<8xf32> to vector<8x1xf32>
    %cst_9 = arith.constant 3.200000e+01 : f32
    %12 = vector.broadcast %cst_9 : f32 to vector<8x1xf32>
    %13 = arith.divf %11, %12 : vector<8x1xf32>
    %14 = arith.mulf %9, %9 : vector<8x32xf32>
    %cst_10 = arith.constant dense<0.000000e+00> : vector<8xf32>
    %15 = vector.multi_reduction <add>, %14, %cst_10 [1] : vector<8x32xf32> to vector<8xf32>
    %16 = vector.shape_cast %15 : vector<8xf32> to vector<8x1xf32>
    %cst_11 = arith.constant 3.200000e+01 : f32
    %17 = vector.broadcast %cst_11 : f32 to vector<8x1xf32>
    %18 = arith.divf %16, %17 : vector<8x1xf32>
    %19 = arith.mulf %13, %13 : vector<8x1xf32>
    %20 = arith.subf %18, %19 : vector<8x1xf32>
    %cst_12 = arith.constant 0.000000e+00 : f32
    %21 = vector.broadcast %cst_12 : f32 to vector<8x1xf32>
    %22 = arith.maximumf %20, %21 : vector<8x1xf32>
    %23 = vector.broadcast %13 : vector<8x1xf32> to vector<8x32xf32>
    %24 = arith.subf %9, %23 : vector<8x32xf32>
    %cst_13 = arith.constant 9.99999974E-6 : f32
    %25 = vector.broadcast %cst_13 : f32 to vector<8x1xf32>
    %26 = arith.addf %22, %25 : vector<8x1xf32>
    %27 = math.rsqrt %26 : vector<8x1xf32>
    %28 = vector.broadcast %27 : vector<8x1xf32> to vector<8x32xf32>
    %29 = arith.mulf %24, %28 : vector<8x32xf32>
    %30 = vector.broadcast %1 : vector<1x32xf32> to vector<8x32xf32>
    %31 = arith.mulf %29, %30 : vector<8x32xf32>
    %32 = vector.broadcast %2 : vector<1x32xf32> to vector<8x32xf32>
    %33 = arith.addf %31, %32 : vector<8x32xf32>
    %cst_14 = arith.constant 0.000000e+00 : f32
    %34 = vector.broadcast %cst_14 : f32 to vector<8x32xf32>
    %35 = arith.maximumf %33, %34 : vector<8x32xf32>
    %c1_15 = arith.constant 1 : index
    %c0_16 = arith.constant 0 : index
    %c0_17 = arith.constant 0 : index
    %36 = vector.load %arg1[%c1_15, %c0_16, %c0_17] : memref<3x32x116xbf16, #tpu.memory_space<vmem>>, vector<1x32x116xbf16>
    %37 = vector.shape_cast %36 : vector<1x32x116xbf16> to vector<32x116xbf16>
    %c3 = arith.constant 3 : index
    %c0_18 = arith.constant 0 : index
    %38 = vector.load %arg2[%c3, %c0_18] : memref<9x116xf32, #tpu.memory_space<vmem>>, vector<1x116xf32>
    %c4 = arith.constant 4 : index
    %c0_19 = arith.constant 0 : index
    %39 = vector.load %arg2[%c4, %c0_19] : memref<9x116xf32, #tpu.memory_space<vmem>>, vector<1x32xf32>
    %c5 = arith.constant 5 : index
    %c0_20 = arith.constant 0 : index
    %40 = vector.load %arg2[%c5, %c0_20] : memref<9x116xf32, #tpu.memory_space<vmem>>, vector<1x32xf32>
    %41 = arith.truncf %35 : vector<8x32xf32> to vector<8x32xbf16>
    %cst_21 = arith.constant dense<0.000000e+00> : vector<8x116xf32>
    %42 = tpu.matmul %41, %37, %cst_21 {dimension_numbers = #tpu.dot_dimension_numbers<[1], [0], [0], [1], [0, 0, 1, 1], [], []>} : vector<8x32xbf16>, vector<32x116xbf16>, vector<8x116xf32> -> vector<8x116xf32>
    %43 = vector.broadcast %38 : vector<1x116xf32> to vector<8x116xf32>
    %44 = arith.addf %42, %43 : vector<8x116xf32>
    %45 = vector.extract_strided_slice %44 {offsets = [0, 0], sizes = [8, 32], strides = [1, 1]} : vector<8x116xf32> to vector<8x32xf32>
    %46 = vector.extract_strided_slice %44 {offsets = [0, 32], sizes = [8, 32], strides = [1, 1]} : vector<8x116xf32> to vector<8x32xf32>
    %47 = vector.extract_strided_slice %44 {offsets = [0, 64], sizes = [8, 32], strides = [1, 1]} : vector<8x116xf32> to vector<8x32xf32>
    %48 = vector.extract_strided_slice %44 {offsets = [0, 96], sizes = [8, 10], strides = [1, 1]} : vector<8x116xf32> to vector<8x10xf32>
    %49 = vector.extract_strided_slice %44 {offsets = [0, 106], sizes = [8, 10], strides = [1, 1]} : vector<8x116xf32> to vector<8x10xf32>
    %50 = arith.mulf %45, %45 : vector<8x32xf32>
    %cst_22 = arith.constant dense<0.000000e+00> : vector<8xf32>
    %51 = vector.multi_reduction <add>, %50, %cst_22 [1] : vector<8x32xf32> to vector<8xf32>
    %52 = vector.shape_cast %51 : vector<8xf32> to vector<8x1xf32>
    %cst_23 = arith.constant 5.000000e-01 : f32
    %53 = vector.broadcast %cst_23 : f32 to vector<8x1xf32>
    %54 = arith.mulf %53, %52 : vector<8x1xf32>
    %55 = arith.mulf %46, %46 : vector<8x32xf32>
    %cst_24 = arith.constant dense<0.000000e+00> : vector<8xf32>
    %56 = vector.multi_reduction <add>, %55, %cst_24 [1] : vector<8x32xf32> to vector<8xf32>
    %57 = vector.shape_cast %56 : vector<8xf32> to vector<8x1xf32>
    %cst_25 = arith.constant 5.000000e-01 : f32
    %58 = vector.broadcast %cst_25 : f32 to vector<8x1xf32>
    %59 = arith.mulf %58, %57 : vector<8x1xf32>
    %60 = vector.broadcast %54 : vector<8x1xf32> to vector<8x10xf32>
    %61 = arith.subf %48, %60 : vector<8x10xf32>
    %cst_26 = arith.constant dense<0xFF800000> : vector<8xf32>
    %62 = vector.multi_reduction <maximumf>, %48, %cst_26 [1] : vector<8x10xf32> to vector<8xf32>
    %63 = vector.shape_cast %62 : vector<8xf32> to vector<8x1xf32>
    %64 = vector.broadcast %63 : vector<8x1xf32> to vector<8x10xf32>
    %65 = arith.subf %61, %64 : vector<8x10xf32>
    %66 = math.exp %65 : vector<8x10xf32>
    %cst_27 = arith.constant 9.99999997E-7 : f32
    %67 = vector.broadcast %cst_27 : f32 to vector<8x10xf32>
    %68 = arith.addf %66, %67 : vector<8x10xf32>
    %69 = vector.broadcast %59 : vector<8x1xf32> to vector<8x10xf32>
    %70 = arith.subf %49, %69 : vector<8x10xf32>
    %71 = vector.shape_cast %49 : vector<8x10xf32> to vector<1x8x10xf32>
    %cst_28 = arith.constant dense<0xFF800000> : vector<1xf32>
    %72 = vector.multi_reduction <maximumf>, %71, %cst_28 [1, 2] : vector<1x8x10xf32> to vector<1xf32>
    %73 = vector.shape_cast %72 : vector<1xf32> to vector<1x1x1xf32>
    %74 = vector.extract %73[0, 0, 0] : f32 from vector<1x1x1xf32>
    %75 = vector.broadcast %74 : f32 to vector<8x10xf32>
    %76 = arith.subf %70, %75 : vector<8x10xf32>
    %77 = math.exp %76 : vector<8x10xf32>
    %cst_29 = arith.constant 9.99999997E-7 : f32
    %78 = vector.broadcast %cst_29 : f32 to vector<8x10xf32>
    %79 = arith.addf %77, %78 : vector<8x10xf32>
    %cst_30 = arith.constant dense<0.000000e+00> : vector<10x32xf32>
    %80 = tpu.matmul %79, %47, %cst_30 {dimension_numbers = #tpu.dot_dimension_numbers<[0], [0], [1], [1], [0, 1, 1, 1], [], []>} : vector<8x10xf32>, vector<8x32xf32>, vector<10x32xf32> -> vector<10x32xf32>
    %cst_31 = arith.constant dense<0.000000e+00> : vector<8x32xf32>
    %81 = tpu.matmul %68, %80, %cst_31 {dimension_numbers = #tpu.dot_dimension_numbers<[1], [0], [0], [1], [0, 0, 1, 1], [], []>} : vector<8x10xf32>, vector<10x32xf32>, vector<8x32xf32> -> vector<8x32xf32>
    %cst_32 = arith.constant dense<0.000000e+00> : vector<10xf32>
    %82 = vector.multi_reduction <add>, %79, %cst_32 [0] : vector<8x10xf32> to vector<10xf32>
    %83 = vector.shape_cast %82 : vector<10xf32> to vector<1x10xf32>
    %84 = vector.broadcast %83 : vector<1x10xf32> to vector<8x10xf32>
    %85 = arith.mulf %68, %84 : vector<8x10xf32>
    %cst_33 = arith.constant dense<0.000000e+00> : vector<8xf32>
    %86 = vector.multi_reduction <add>, %85, %cst_33 [1] : vector<8x10xf32> to vector<8xf32>
    %87 = vector.shape_cast %86 : vector<8xf32> to vector<8x1xf32>
    %88 = tpu.reciprocal %87 {approx = true} : vector<8x1xf32> -> vector<8x1xf32>
    %89 = arith.mulf %87, %88 : vector<8x1xf32>
    %cst_34 = arith.constant 2.000000e+00 : f32
    %90 = vector.broadcast %cst_34 : f32 to vector<8x1xf32>
    %91 = arith.subf %90, %89 : vector<8x1xf32>
    %92 = arith.mulf %88, %91 : vector<8x1xf32>
    %93 = vector.broadcast %92 : vector<8x1xf32> to vector<8x32xf32>
    %94 = arith.mulf %81, %93 : vector<8x32xf32>
    %cst_35 = arith.constant 5.000000e-01 : f32
    %95 = vector.broadcast %cst_35 : f32 to vector<8x32xf32>
    %96 = arith.mulf %95, %94 : vector<8x32xf32>
    %cst_36 = arith.constant 5.000000e-01 : f32
    %97 = vector.broadcast %cst_36 : f32 to vector<8x32xf32>
    %98 = arith.mulf %97, %35 : vector<8x32xf32>
    %99 = arith.addf %96, %98 : vector<8x32xf32>
    %cst_37 = arith.constant dense<0.000000e+00> : vector<8xf32>
    %100 = vector.multi_reduction <add>, %99, %cst_37 [1] : vector<8x32xf32> to vector<8xf32>
    %101 = vector.shape_cast %100 : vector<8xf32> to vector<8x1xf32>
    %cst_38 = arith.constant 3.200000e+01 : f32
    %102 = vector.broadcast %cst_38 : f32 to vector<8x1xf32>
    %103 = arith.divf %101, %102 : vector<8x1xf32>
    %104 = arith.mulf %99, %99 : vector<8x32xf32>
    %cst_39 = arith.constant dense<0.000000e+00> : vector<8xf32>
    %105 = vector.multi_reduction <add>, %104, %cst_39 [1] : vector<8x32xf32> to vector<8xf32>
    %106 = vector.shape_cast %105 : vector<8xf32> to vector<8x1xf32>
    %cst_40 = arith.constant 3.200000e+01 : f32
    %107 = vector.broadcast %cst_40 : f32 to vector<8x1xf32>
    %108 = arith.divf %106, %107 : vector<8x1xf32>
    %109 = arith.mulf %103, %103 : vector<8x1xf32>
    %110 = arith.subf %108, %109 : vector<8x1xf32>
    %cst_41 = arith.constant 0.000000e+00 : f32
    %111 = vector.broadcast %cst_41 : f32 to vector<8x1xf32>
    %112 = arith.maximumf %110, %111 : vector<8x1xf32>
    %113 = vector.broadcast %103 : vector<8x1xf32> to vector<8x32xf32>
    %114 = arith.subf %99, %113 : vector<8x32xf32>
    %cst_42 = arith.constant 9.99999974E-6 : f32
    %115 = vector.broadcast %cst_42 : f32 to vector<8x1xf32>
    %116 = arith.addf %112, %115 : vector<8x1xf32>
    %117 = math.rsqrt %116 : vector<8x1xf32>
    %118 = vector.broadcast %117 : vector<8x1xf32> to vector<8x32xf32>
    %119 = arith.mulf %114, %118 : vector<8x32xf32>
    %120 = vector.broadcast %39 : vector<1x32xf32> to vector<8x32xf32>
    %121 = arith.mulf %119, %120 : vector<8x32xf32>
    %122 = vector.broadcast %40 : vector<1x32xf32> to vector<8x32xf32>
    %123 = arith.addf %121, %122 : vector<8x32xf32>
    %c2_43 = arith.constant 2 : index
    %c0_44 = arith.constant 0 : index
    %c0_45 = arith.constant 0 : index
    %124 = vector.load %arg1[%c2_43, %c0_44, %c0_45] : memref<3x32x116xbf16, #tpu.memory_space<vmem>>, vector<1x32x116xbf16>
    %125 = vector.shape_cast %124 : vector<1x32x116xbf16> to vector<32x116xbf16>
    %c6 = arith.constant 6 : index
    %c0_46 = arith.constant 0 : index
    %126 = vector.load %arg2[%c6, %c0_46] : memref<9x116xf32, #tpu.memory_space<vmem>>, vector<1x116xf32>
    %c7 = arith.constant 7 : index
    %c0_47 = arith.constant 0 : index
    %127 = vector.load %arg2[%c7, %c0_47] : memref<9x116xf32, #tpu.memory_space<vmem>>, vector<1x32xf32>
    %c8 = arith.constant 8 : index
    %c0_48 = arith.constant 0 : index
    %128 = vector.load %arg2[%c8, %c0_48] : memref<9x116xf32, #tpu.memory_space<vmem>>, vector<1x32xf32>
    %129 = arith.truncf %123 : vector<8x32xf32> to vector<8x32xbf16>
    %cst_49 = arith.constant dense<0.000000e+00> : vector<8x116xf32>
    %130 = tpu.matmul %129, %125, %cst_49 {dimension_numbers = #tpu.dot_dimension_numbers<[1], [0], [0], [1], [0, 0, 1, 1], [], []>} : vector<8x32xbf16>, vector<32x116xbf16>, vector<8x116xf32> -> vector<8x116xf32>
    %131 = vector.broadcast %126 : vector<1x116xf32> to vector<8x116xf32>
    %132 = arith.addf %130, %131 : vector<8x116xf32>
    %133 = vector.extract_strided_slice %132 {offsets = [0, 0], sizes = [8, 32], strides = [1, 1]} : vector<8x116xf32> to vector<8x32xf32>
    %134 = vector.extract_strided_slice %132 {offsets = [0, 32], sizes = [8, 32], strides = [1, 1]} : vector<8x116xf32> to vector<8x32xf32>
    %135 = vector.extract_strided_slice %132 {offsets = [0, 64], sizes = [8, 32], strides = [1, 1]} : vector<8x116xf32> to vector<8x32xf32>
    %136 = vector.extract_strided_slice %132 {offsets = [0, 96], sizes = [8, 10], strides = [1, 1]} : vector<8x116xf32> to vector<8x10xf32>
    %137 = vector.extract_strided_slice %132 {offsets = [0, 106], sizes = [8, 10], strides = [1, 1]} : vector<8x116xf32> to vector<8x10xf32>
    %138 = arith.mulf %133, %133 : vector<8x32xf32>
    %cst_50 = arith.constant dense<0.000000e+00> : vector<8xf32>
    %139 = vector.multi_reduction <add>, %138, %cst_50 [1] : vector<8x32xf32> to vector<8xf32>
    %140 = vector.shape_cast %139 : vector<8xf32> to vector<8x1xf32>
    %cst_51 = arith.constant 5.000000e-01 : f32
    %141 = vector.broadcast %cst_51 : f32 to vector<8x1xf32>
    %142 = arith.mulf %141, %140 : vector<8x1xf32>
    %143 = arith.mulf %134, %134 : vector<8x32xf32>
    %cst_52 = arith.constant dense<0.000000e+00> : vector<8xf32>
    %144 = vector.multi_reduction <add>, %143, %cst_52 [1] : vector<8x32xf32> to vector<8xf32>
    %145 = vector.shape_cast %144 : vector<8xf32> to vector<8x1xf32>
    %cst_53 = arith.constant 5.000000e-01 : f32
    %146 = vector.broadcast %cst_53 : f32 to vector<8x1xf32>
    %147 = arith.mulf %146, %145 : vector<8x1xf32>
    %148 = vector.broadcast %142 : vector<8x1xf32> to vector<8x10xf32>
    %149 = arith.subf %136, %148 : vector<8x10xf32>
    %cst_54 = arith.constant dense<0xFF800000> : vector<8xf32>
    %150 = vector.multi_reduction <maximumf>, %136, %cst_54 [1] : vector<8x10xf32> to vector<8xf32>
    %151 = vector.shape_cast %150 : vector<8xf32> to vector<8x1xf32>
    %152 = vector.broadcast %151 : vector<8x1xf32> to vector<8x10xf32>
    %153 = arith.subf %149, %152 : vector<8x10xf32>
    %154 = math.exp %153 : vector<8x10xf32>
    %cst_55 = arith.constant 9.99999997E-7 : f32
    %155 = vector.broadcast %cst_55 : f32 to vector<8x10xf32>
    %156 = arith.addf %154, %155 : vector<8x10xf32>
    %157 = vector.broadcast %147 : vector<8x1xf32> to vector<8x10xf32>
    %158 = arith.subf %137, %157 : vector<8x10xf32>
    %159 = vector.shape_cast %137 : vector<8x10xf32> to vector<1x8x10xf32>
    %cst_56 = arith.constant dense<0xFF800000> : vector<1xf32>
    %160 = vector.multi_reduction <maximumf>, %159, %cst_56 [1, 2] : vector<1x8x10xf32> to vector<1xf32>
    %161 = vector.shape_cast %160 : vector<1xf32> to vector<1x1x1xf32>
    %162 = vector.extract %161[0, 0, 0] : f32 from vector<1x1x1xf32>
    %163 = vector.broadcast %162 : f32 to vector<8x10xf32>
    %164 = arith.subf %158, %163 : vector<8x10xf32>
    %165 = math.exp %164 : vector<8x10xf32>
    %cst_57 = arith.constant 9.99999997E-7 : f32
    %166 = vector.broadcast %cst_57 : f32 to vector<8x10xf32>
    %167 = arith.addf %165, %166 : vector<8x10xf32>
    %cst_58 = arith.constant dense<0.000000e+00> : vector<10x32xf32>
    %168 = tpu.matmul %167, %135, %cst_58 {dimension_numbers = #tpu.dot_dimension_numbers<[0], [0], [1], [1], [0, 1, 1, 1], [], []>} : vector<8x10xf32>, vector<8x32xf32>, vector<10x32xf32> -> vector<10x32xf32>
    %cst_59 = arith.constant dense<0.000000e+00> : vector<8x32xf32>
    %169 = tpu.matmul %156, %168, %cst_59 {dimension_numbers = #tpu.dot_dimension_numbers<[1], [0], [0], [1], [0, 0, 1, 1], [], []>} : vector<8x10xf32>, vector<10x32xf32>, vector<8x32xf32> -> vector<8x32xf32>
    %cst_60 = arith.constant dense<0.000000e+00> : vector<10xf32>
    %170 = vector.multi_reduction <add>, %167, %cst_60 [0] : vector<8x10xf32> to vector<10xf32>
    %171 = vector.shape_cast %170 : vector<10xf32> to vector<1x10xf32>
    %172 = vector.broadcast %171 : vector<1x10xf32> to vector<8x10xf32>
    %173 = arith.mulf %156, %172 : vector<8x10xf32>
    %cst_61 = arith.constant dense<0.000000e+00> : vector<8xf32>
    %174 = vector.multi_reduction <add>, %173, %cst_61 [1] : vector<8x10xf32> to vector<8xf32>
    %175 = vector.shape_cast %174 : vector<8xf32> to vector<8x1xf32>
    %176 = tpu.reciprocal %175 {approx = true} : vector<8x1xf32> -> vector<8x1xf32>
    %177 = arith.mulf %175, %176 : vector<8x1xf32>
    %cst_62 = arith.constant 2.000000e+00 : f32
    %178 = vector.broadcast %cst_62 : f32 to vector<8x1xf32>
    %179 = arith.subf %178, %177 : vector<8x1xf32>
    %180 = arith.mulf %176, %179 : vector<8x1xf32>
    %181 = vector.broadcast %180 : vector<8x1xf32> to vector<8x32xf32>
    %182 = arith.mulf %169, %181 : vector<8x32xf32>
    %cst_63 = arith.constant 5.000000e-01 : f32
    %183 = vector.broadcast %cst_63 : f32 to vector<8x32xf32>
    %184 = arith.mulf %183, %182 : vector<8x32xf32>
    %cst_64 = arith.constant 5.000000e-01 : f32
    %185 = vector.broadcast %cst_64 : f32 to vector<8x32xf32>
    %186 = arith.mulf %185, %123 : vector<8x32xf32>
    %187 = arith.addf %184, %186 : vector<8x32xf32>
    %cst_65 = arith.constant dense<0.000000e+00> : vector<8xf32>
    %188 = vector.multi_reduction <add>, %187, %cst_65 [1] : vector<8x32xf32> to vector<8xf32>
    %189 = vector.shape_cast %188 : vector<8xf32> to vector<8x1xf32>
    %cst_66 = arith.constant 3.200000e+01 : f32
    %190 = vector.broadcast %cst_66 : f32 to vector<8x1xf32>
    %191 = arith.divf %189, %190 : vector<8x1xf32>
    %192 = arith.mulf %187, %187 : vector<8x32xf32>
    %cst_67 = arith.constant dense<0.000000e+00> : vector<8xf32>
    %193 = vector.multi_reduction <add>, %192, %cst_67 [1] : vector<8x32xf32> to vector<8xf32>
    %194 = vector.shape_cast %193 : vector<8xf32> to vector<8x1xf32>
    %cst_68 = arith.constant 3.200000e+01 : f32
    %195 = vector.broadcast %cst_68 : f32 to vector<8x1xf32>
    %196 = arith.divf %194, %195 : vector<8x1xf32>
    %197 = arith.mulf %191, %191 : vector<8x1xf32>
    %198 = arith.subf %196, %197 : vector<8x1xf32>
    %cst_69 = arith.constant 0.000000e+00 : f32
    %199 = vector.broadcast %cst_69 : f32 to vector<8x1xf32>
    %200 = arith.maximumf %198, %199 : vector<8x1xf32>
    %201 = vector.broadcast %191 : vector<8x1xf32> to vector<8x32xf32>
    %202 = arith.subf %187, %201 : vector<8x32xf32>
    %cst_70 = arith.constant 9.99999974E-6 : f32
    %203 = vector.broadcast %cst_70 : f32 to vector<8x1xf32>
    %204 = arith.addf %200, %203 : vector<8x1xf32>
    %205 = math.rsqrt %204 : vector<8x1xf32>
    %206 = vector.broadcast %205 : vector<8x1xf32> to vector<8x32xf32>
    %207 = arith.mulf %202, %206 : vector<8x32xf32>
    %208 = vector.broadcast %127 : vector<1x32xf32> to vector<8x32xf32>
    %209 = arith.mulf %207, %208 : vector<8x32xf32>
    %210 = vector.broadcast %128 : vector<1x32xf32> to vector<8x32xf32>
    %211 = arith.addf %209, %210 : vector<8x32xf32>
    %c0_71 = arith.constant 0 : index
    %c0_72 = arith.constant 0 : index
    %212 = vector.load %arg3[%c0_71, %c0_72] : memref<8x32xf32, #tpu.memory_space<vmem>>, vector<8x32xf32>
    tpu.vector_store %arg3[%c0_71, %c0_72], %211 {strides = array<i32>} : memref<8x32xf32, #tpu.memory_space<vmem>>, vector<8x32xf32>,
    return
  }
}

</mosaic_0001>

<llo_original>
// kernel: transconv_forward.1
$region0: #{transconv_forward.1}
  #allocation0 [shape = 'u32[]', space=smem, size = 0x4, offset = 0x4, fixed_abs, tag = 'smem constant byte address 0x4 - core index']
  #allocation1 [shape = 'u32[144,128]{1,0:T(1,128)}', space=vmem, size = 0x12000, scoped, tag = 'internal scratch']
  %s0 = inlined_call_operand.vmem [shape: bf16[8,32], index: 0, kind: input, shape index: {}]
  %s1 = inlined_call_operand.hbm [shape: bf16[3,32,116], index: 1, kind: input, shape index: {}]
  %s2 = inlined_call_operand.vmem [shape: f32[9,116], index: 2, kind: input, shape index: {}]
  %s3 = inlined_call_operand.hbm [shape: f32[8,32], index: 3, kind: output, shape index: {}]
  %s4 = sld [smem:[#allocation0]]
  $region26: #{transconv_forward.1} parent=0
    _
  %s6 = ssub.s32 1, %s4
  %s7 = scalar_select 0, %s6, %s4
  $region1: #{transconv_forward.1} parent=0
    #allocation2 [shape = 'u8[24576]{0}', space=vmem, size = 0x6000, scoped, tag = 'input window, operand 1, single buffered']
    #allocation3 [shape = 's32[1]{0}', space=sflag, size = 0x4, scoped, tag = 'scoped memory for transconv_forward.1']
    #allocation4 [shape = 's32[1]{0}', space=sflag, size = 0x4, scoped, tag = 'scoped memory for transconv_forward.1']
    #allocation5 [shape = 'u8[4096]{0}', space=vmem, size = 0x1000, scoped, tag = 'output window, operand 0, single buffered']
    %8 = vsyncpa [#allocation3], 0
    %9 = vsyncpa [#allocation4], 0
    // Predicated region
    $region2: #{transconv_forward.1} parent=1 // pred_check
      _
    $region3: #{transconv_forward.1} parent=1 // pred_check_branch
      %11 = sbr.rel (0) target = $region5
    $region4: #{transconv_forward.1} parent=1 // pred_region
      _
    $region5: #{transconv_forward.1} parent=1 // pred_fallthru
      _
    // Predicated region
    $region6: #{transconv_forward.1} parent=1 // pred_check
      _
    $region7: #{transconv_forward.1} parent=1 // pred_check_branch
      %13 = sbr.rel (0) target = $region9
    $region8: #{transconv_forward.1} parent=1 // pred_region
      %s15 = ssub.s32 768, 768
      %16 = vsyncadd [#allocation3], %s15
      %s17 = sshll.u32 [#allocation2], 4
      %s18 = int_to_ptr.vmem [resolvable:$true] %s17
      %23 = dma.hbm_to_vmem [thread:$0]  %s1, 768, %s18, [#allocation3], 64, 64, 4
    $region9: #{transconv_forward.1} parent=1 // pred_fallthru
      _
    // Predicated region
    $region10: #{transconv_forward.1} parent=1 // pred_check
      _
    $region11: #{transconv_forward.1} parent=1 // pred_check_branch
      %25 = sbr.rel (0) target = $region13
    $region12: #{transconv_forward.1} parent=1 // pred_region
      _
    $region13: #{transconv_forward.1} parent=1 // pred_fallthru
      _
    // Predicated region
    $region14: #{transconv_forward.1} parent=1 // pred_check
      _
    $region15: #{transconv_forward.1} parent=1 // pred_check_branch
      %27 = sbr.rel (0) target = $region17
    $region16: #{transconv_forward.1} parent=1 // pred_region
      %28 = dma.done [#allocation3], 768
    $region17: #{transconv_forward.1} parent=1 // pred_fallthru
      _
    %v30 = vld [vmem:[%s2] sm:$0x1]
    %v31 = vld [vmem:[%s2 + $0x1] sm:$0x1]
    %v32 = vld [vmem:[%s2 + $0x2] sm:$0x1]
    %v33 = vld [vmem:[%s0] sm:$0xf]
    %v34 = vld [vmem:[#allocation2] sm:$0xf]
    %v35 = vld [vmem:[#allocation2 + $0x4] sm:$0xf]
    %v36 = vld [vmem:[#allocation2 + $0x8] sm:$0xf]
    %v37 = vld [vmem:[#allocation2 + $0xc] sm:$0xf]
    %v42 = vunpack.c.l.b16 %v34
    %v43 = vunpack.c.l.b16 %v35
    %v44 = vunpack.c.l.b16 %v36
    %v45 = vunpack.c.l.b16 %v37
    %v46 = vpack.c.b16 %v43, %v42
    %v47 = vpack.c.b16 %v45, %v44
    %vm50 = vcmask 261120
    %v52 = vsel %vm50, %v33, 0
    %54 = vmatprep.subr.bf16.mxu0 0
    %55 = vmatpush1.bf16.msra.mxu0 %v46
    %56 = vmatprep.subr.bf16.mxu0 0
    %57 = vmatpush1.bf16.msra.mxu0 %v47
    %58 = vmatprep.subr.bf16.mxu0 0
    %59 = vmatpush1.bf16.msra.mxu0 0
    %60 = vmatprep.subr.bf16.mxu0 0
    %61 = vmatpush1.bf16.msra.mxu0 0
    %62 = vmatprep.subr.bf16.mxu0 0
    %63 = vmatpush1.bf16.msra.mxu0 0
    %64 = vmatprep.subr.bf16.mxu0 0
    %65 = vmatpush1.bf16.msra.mxu0 0
    %66 = vmatprep.subr.bf16.mxu0 0
    %67 = vmatpush1.bf16.msra.mxu0 0
    %68 = vmatprep.subr.bf16.mxu0 0
    %69 = vmatpush1.bf16.msra.mxu0 0
    %70 = vmatprep.subr.bf16.mxu0 0
    %71 = vmatpush1.bf16.msra.mxu0 0
    %72 = vmatprep.subr.bf16.mxu0 0
    %73 = vmatpush1.bf16.msra.mxu0 0
    %74 = vmatprep.subr.bf16.mxu0 0
    %75 = vmatpush1.bf16.msra.mxu0 0
    %76 = vmatprep.subr.bf16.mxu0 0
    %77 = vmatpush1.bf16.msra.mxu0 0
    %78 = vmatprep.subr.bf16.mxu0 0
    %79 = vmatpush1.bf16.msra.mxu0 0
    %80 = vmatprep.subr.bf16.mxu0 0
    %81 = vmatpush1.bf16.msra.mxu0 0
    %82 = vmatprep.subr.bf16.mxu0 0
    %83 = vmatpush1.bf16.msra.mxu0 0
    %84 = vmatprep.subr.bf16.mxu0 0
    %85 = vmatpush1.bf16.msra.mxu0 0
    %86 = vmatprep.mubr.bf16.mxu0 0
    %87 = vmatmul.mubr.bf16.gmra.mrb[0].mxu0 %v52
    %v88 = vpop.f32.mrb[0].mxu0
    %v89 = vadd.f32 0.0, %v88
    %v90 = vpop.f32.mrb[0].mxu0
    %v91 = vpop.f32.mrb[0].mxu0
    %v92 = vpop.f32.mrb[0].mxu0
    %93 = vdwg.mxu0
    %v94 = vlaneseq
    %v95 = vshrl.u32 %v94, 7
    %v96 = vsub.s32 0, %v95
    %v97 = vrot.slane %v30, %v96
    %v98 = vadd.f32 %v89, %v97
    %v99 = vsel %vm50, %v98, 0.0
    %100 = vadd.xlane.f32.xlu0 %v99
    %v101 = vpop.xlane.xlu0 %100
    %v102 = vrcp.pop 32.0
    %v103 = vmul.f32 %v101, %v102
    %v104 = vmul.f32 %v98, %v98
    %v105 = vsel %vm50, %v104, 0.0
    %106 = vadd.xlane.f32.xlu0 %v105
    %v107 = vpop.xlane.xlu0 %106
    %v108 = vmul.f32 %v107, %v102
    %v109 = vmul.f32 %v103, %v103
    %v110 = vsub.f32 %v108, %v109
    %v111 = vmax.f32 %v110, 0.0
    %v112 = vsub.f32 %v98, %v103
    %v113 = vadd.f32 %v111, 1e-05
    %v114 = vrsqrt.pop %v113
    %v115 = vmul.f32 %v112, %v114
    %v116 = vlaneseq
    %v117 = vshrl.u32 %v116, 7
    %v118 = vsub.s32 0, %v117
    %v119 = vrot.slane %v31, %v118
    %v120 = vmul.f32 %v115, %v119
    %v121 = vlaneseq
    %v122 = vshrl.u32 %v121, 7
    %v123 = vsub.s32 0, %v122
    %v124 = vrot.slane %v32, %v123
    %v125 = vadd.f32 %v120, %v124
    %v126 = vmax.f32 %v125, 0.0
    %s127 = scalar_lea.vmem [#allocation2], 16
    %v128 = vld [vmem:[%s127] sm:$0xf]
    %v129 = vld [vmem:[%s127 + $0x4] sm:$0xf]
    %v130 = vld [vmem:[%s127 + $0x8] sm:$0xf]
    %v131 = vld [vmem:[%s127 + $0xc] sm:$0xf]
    %v132 = vld [vmem:[%s2 + $0x3] sm:$0x1]
    %v133 = vld [vmem:[%s2 + $0x4] sm:$0x1]
    %v134 = vld [vmem:[%s2 + $0x5] sm:$0x1]
    %v135 = vpack.c.bf16 %v126, %v126
    %v136 = vlaneseq
    %v137 = vshrl.u32 %v136, 7
    %v138 = vsub.s32 0, %v137
    %v139 = vrot.slane %v132, %v138
    %v144 = vunpack.c.l.b16 %v128
    %v145 = vunpack.c.l.b16 %v129
    %v146 = vunpack.c.l.b16 %v130
    %v147 = vunpack.c.l.b16 %v131
    %v148 = vpack.c.b16 %v145, %v144
    %v149 = vpack.c.b16 %v147, %v146
    %v153 = vsel %vm50, %v135, 0
    %155 = vmatprep.subr.bf16.mxu0 0
    %156 = vmatpush1.bf16.msra.mxu0 %v148
    %157 = vmatprep.subr.bf16.mxu0 0
    %158 = vmatpush1.bf16.msra.mxu0 %v149
    %159 = vmatprep.subr.bf16.mxu0 0
    %160 = vmatpush1.bf16.msra.mxu0 0
    %161 = vmatprep.subr.bf16.mxu0 0
    %162 = vmatpush1.bf16.msra.mxu0 0
    %163 = vmatprep.subr.bf16.mxu0 0
    %164 = vmatpush1.bf16.msra.mxu0 0
    %165 = vmatprep.subr.bf16.mxu0 0
    %166 = vmatpush1.bf16.msra.mxu0 0
    %167 = vmatprep.subr.bf16.mxu0 0
    %168 = vmatpush1.bf16.msra.mxu0 0
    %169 = vmatprep.subr.bf16.mxu0 0
    %170 = vmatpush1.bf16.msra.mxu0 0
    %171 = vmatprep.subr.bf16.mxu0 0
    %172 = vmatpush1.bf16.msra.mxu0 0
    %173 = vmatprep.subr.bf16.mxu0 0
    %174 = vmatpush1.bf16.msra.mxu0 0
    %175 = vmatprep.subr.bf16.mxu0 0
    %176 = vmatpush1.bf16.msra.mxu0 0
    %177 = vmatprep.subr.bf16.mxu0 0
    %178 = vmatpush1.bf16.msra.mxu0 0
    %179 = vmatprep.subr.bf16.mxu0 0
    %180 = vmatpush1.bf16.msra.mxu0 0
    %181 = vmatprep.subr.bf16.mxu0 0
    %182 = vmatpush1.bf16.msra.mxu0 0
    %183 = vmatprep.subr.bf16.mxu0 0
    %184 = vmatpush1.bf16.msra.mxu0 0
    %185 = vmatprep.subr.bf16.mxu0 0
    %186 = vmatpush1.bf16.msra.mxu0 0
    %187 = vmatprep.mubr.bf16.mxu0 0
    %188 = vmatmul.mubr.bf16.gmra.mrb[0].mxu0 %v153
    %v189 = vpop.f32.mrb[0].mxu0
    %v190 = vadd.f32 %v139, %v189
    %v191 = vpop.f32.mrb[0].mxu0
    %v192 = vpop.f32.mrb[0].mxu0
    %v193 = vpop.f32.mrb[0].mxu0
    %194 = vdwg.mxu0
    %v195 = vmul.f32 %v190, %v190
    %v196 = vsel %vm50, %v195, 0.0
    %197 = vadd.xlane.f32.xlu0 %v196
    %v198 = vpop.xlane.xlu0 %197
    %v199 = vmul.f32 %v198, 0.5
    %201 = vrot.lane.b32.xlu0 %v195, 96
    %v202 = vpop.permute.xlu0 %201
    %v204 = vsel %vm50, %v202, 0.0
    %205 = vadd.xlane.f32.xlu0 %v204
    %v206 = vpop.xlane.xlu0 %205
    %v207 = vmul.f32 %v206, 0.5
    %v208 = vsub.f32 %v190, %v199
    %vm209 = vcmask 868096
    %v210 = vsel %vm209, %v190, -inf
    %211 = vmax.xlane.f32.xlu0 %v210
    %v212 = vpop.xlane.xlu0 %211
    %v213 = vsub.f32 %v208, %v212
    %v214 = vmul.f32 %v213, 1.442695
    %v215 = vpow.pop %v214
    %v216 = vadd.f32 %v215, 1e-06
    %v217 = vsub.f32 %v190, %v207
    %vm218 = vcmask 950096
    %v219 = vsel %vm218, %v190, -inf
    %220 = vmax.xlane.f32.xlu0 %v219
    %v221 = vpop.xlane.xlu0 %220
    %v222 = vrot.slane %v221, 4
    %v223 = vmax.f32 %v221, %v222
    %v224 = vrot.slane %v223, 2
    %v225 = vmax.f32 %v223, %v224
    %v226 = vrot.slane %v225, 1
    %v227 = vmax.f32 %v225, %v226
    %s228 = vtos %v227
    %v229 = vstv %s228
    %v230 = vsub.f32 %v217, %v229
    %v231 = vmul.f32 %v230, 1.442695
    %v232 = vpow.pop %v231
    %v233 = vadd.f32 %v232, 1e-06
    %235 = vrot.lane.b32.xlu0 %v233, 22
    %v236 = vpop.permute.xlu0 %235
    %238 = vxpose.xlu0.b32.start [1/16] %v236, 128
    %239 = vxpose.xlu0.b32.cont [2/16] 0.0, 128
    %240 = vxpose.xlu0.b32.cont [3/16] 0.0, 128
    %241 = vxpose.xlu0.b32.cont [4/16] 0.0, 128
    %242 = vxpose.xlu0.b32.cont [5/16] 0.0, 128
    %243 = vxpose.xlu0.b32.cont [6/16] 0.0, 128
    %244 = vxpose.xlu0.b32.cont [7/16] 0.0, 128
    %245 = vxpose.xlu0.b32.cont [8/16] 0.0, 128
    %246 = vxpose.xlu0.b32.cont [9/16] 0.0, 128
    %247 = vxpose.xlu0.b32.cont [10/16] 0.0, 128
    %248 = vxpose.xlu0.b32.cont [11/16] 0.0, 128
    %249 = vxpose.xlu0.b32.cont [12/16] 0.0, 128
    %250 = vxpose.xlu0.b32.cont [13/16] 0.0, 128
    %251 = vxpose.xlu0.b32.cont [14/16] 0.0, 128
    %252 = vxpose.xlu0.b32.cont [15/16] 0.0, 128
    %253 = vxpose.xlu0.b32.end [16/16] 0.0, 128
    %v254 = vpop.trf.xlu0
    %v255 = vpop.trf.xlu0
    %v256 = vpop.trf.xlu0
    %v257 = vpop.trf.xlu0
    %v258 = vpop.trf.xlu0
    %v259 = vpop.trf.xlu0
    %v260 = vpop.trf.xlu0
    %v261 = vpop.trf.xlu0
    %v262 = vpop.trf.xlu0
    %v263 = vpop.trf.xlu0
    %v264 = vpop.trf.xlu0
    %v265 = vpop.trf.xlu0
    %v266 = vpop.trf.xlu0
    %v267 = vpop.trf.xlu0
    %v268 = vpop.trf.xlu0
    %v269 = vpop.trf.xlu0
    %271 = vrot.lane.b32.xlu0 %v190, 64
    %v272 = vpop.permute.xlu0 %271
    %vm274 = vcmask 64512
    %v276 = vsel %vm274, %v254, 0
    %v279 = vsel %vm274, %v255, 0
    %281 = vmatprep.subr.mxu0 0.0
    %282 = vmatpush1.msra.mxu0 %v272
    %283 = vmatprep.subr.mxu0 0.0
    %284 = vmatpush1.msra.mxu0 0.0
    %285 = vmatprep.subr.mxu0 0.0
    %286 = vmatpush1.msra.mxu0 0.0
    %287 = vmatprep.subr.mxu0 0.0
    %288 = vmatpush1.msra.mxu0 0.0
    %289 = vmatprep.subr.mxu0 0.0
    %290 = vmatpush1.msra.mxu0 0.0
    %291 = vmatprep.subr.mxu0 0.0
    %292 = vmatpush1.msra.mxu0 0.0
    %293 = vmatprep.subr.mxu0 0.0
    %294 = vmatpush1.msra.mxu0 0.0
    %295 = vmatprep.subr.mxu0 0.0
    %296 = vmatpush1.msra.mxu0 0.0
    %297 = vmatprep.subr.mxu0 0.0
    %298 = vmatpush1.msra.mxu0 0.0
    %299 = vmatprep.subr.mxu0 0.0
    %300 = vmatpush1.msra.mxu0 0.0
    %301 = vmatprep.subr.mxu0 0.0
    %302 = vmatpush1.msra.mxu0 0.0
    %303 = vmatprep.subr.mxu0 0.0
    %304 = vmatpush1.msra.mxu0 0.0
    %305 = vmatprep.subr.mxu0 0.0
    %306 = vmatpush1.msra.mxu0 0.0
    %307 = vmatprep.subr.mxu0 0.0
    %308 = vmatpush1.msra.mxu0 0.0
    %309 = vmatprep.subr.mxu0 0.0
    %310 = vmatpush1.msra.mxu0 0.0
    %311 = vmatprep.subr.mxu0 0.0
    %312 = vmatpush1.msra.mxu0 0.0
    %313 = vmatprep.subr.mxu0 0.0
    %314 = vmatpush1.msra.mxu0 0.0
    %315 = vmatprep.subr.mxu0 0.0
    %316 = vmatpush1.msra.mxu0 0.0
    %317 = vmatprep.subr.mxu0 0.0
    %318 = vmatpush1.msra.mxu0 0.0
    %319 = vmatprep.subr.mxu0 0.0
    %320 = vmatpush1.msra.mxu0 0.0
    %321 = vmatprep.subr.mxu0 0.0
    %322 = vmatpush1.msra.mxu0 0.0
    %323 = vmatprep.subr.mxu0 0.0
    %324 = vmatpush1.msra.mxu0 0.0
    %325 = vmatprep.subr.mxu0 0.0
    %326 = vmatpush1.msra.mxu0 0.0
    %327 = vmatprep.subr.mxu0 0.0
    %328 = vmatpush1.msra.mxu0 0.0
    %329 = vmatprep.subr.mxu0 0.0
    %330 = vmatpush1.msra.mxu0 0.0
    %331 = vmatprep.subr.mxu0 0.0
    %332 = vmatpush1.msra.mxu0 0.0
    %333 = vmatprep.subr.mxu0 0.0
    %334 = vmatpush1.msra.mxu0 0.0
    %335 = vmatprep.subr.mxu0 0.0
    %336 = vmatpush1.msra.mxu0 0.0
    %337 = vmatprep.subr.mxu0 0.0
    %338 = vmatpush1.msra.mxu0 0.0
    %339 = vmatprep.subr.mxu0 0.0
    %340 = vmatpush1.msra.mxu0 0.0
    %341 = vmatprep.subr.mxu0 0.0
    %342 = vmatpush1.msra.mxu0 0.0
    %343 = vmatprep.subr.mxu0 0.0
    %344 = vmatpush1.msra.mxu0 0.0
    %345 = vmatprep.mubr.f32.mxu0 0.0
    %346 = vmatmul.mubr.f32.gmra.mrb[0].mxu0 %v276
    %v347 = vpop.f32.mrb[0].mxu0
    %v348 = vadd.f32 0.0, %v347
    %v349 = vpop.f32.mrb[0].mxu0
    %350 = vmatprep.mubr.f32.mxu0 0.0
    %351 = vmatmul.mubr.f32.gmra.mrb[0].mxu0 %v279
    %v352 = vpop.f32.mrb[0].mxu0
    %v353 = vadd.f32 0.0, %v352
    %v354 = vpop.f32.mrb[0].mxu0
    %355 = vdwg.mxu0
    %357 = vrot.lane.b32.xlu0 %v216, 32
    %v358 = vpop.permute.xlu0 %357
    %vm359 = vcmask 80896
    %v360 = vsel %vm359, %v358, 0
    %vm362 = vcmask 1041408
    %v364 = vsel %vm362, %v353, 0
    %366 = vmatprep.subr.mxu0 0.0
    %367 = vmatpush1.msra.mxu0 %v348
    %368 = vmatprep.subr.mxu0 0.0
    %369 = vmatpush1.msra.mxu0 %v364
    %370 = vmatprep.subr.mxu0 0.0
    %371 = vmatpush1.msra.mxu0 0.0
    %372 = vmatprep.subr.mxu0 0.0
    %373 = vmatpush1.msra.mxu0 0.0
    %374 = vmatprep.subr.mxu0 0.0
    %375 = vmatpush1.msra.mxu0 0.0
    %376 = vmatprep.subr.mxu0 0.0
    %377 = vmatpush1.msra.mxu0 0.0
    %378 = vmatprep.subr.mxu0 0.0
    %379 = vmatpush1.msra.mxu0 0.0
    %380 = vmatprep.subr.mxu0 0.0
    %381 = vmatpush1.msra.mxu0 0.0
    %382 = vmatprep.subr.mxu0 0.0
    %383 = vmatpush1.msra.mxu0 0.0
    %384 = vmatprep.subr.mxu0 0.0
    %385 = vmatpush1.msra.mxu0 0.0
    %386 = vmatprep.subr.mxu0 0.0
    %387 = vmatpush1.msra.mxu0 0.0
    %388 = vmatprep.subr.mxu0 0.0
    %389 = vmatpush1.msra.mxu0 0.0
    %390 = vmatprep.subr.mxu0 0.0
    %391 = vmatpush1.msra.mxu0 0.0
    %392 = vmatprep.subr.mxu0 0.0
    %393 = vmatpush1.msra.mxu0 0.0
    %394 = vmatprep.subr.mxu0 0.0
    %395 = vmatpush1.msra.mxu0 0.0
    %396 = vmatprep.subr.mxu0 0.0
    %397 = vmatpush1.msra.mxu0 0.0
    %398 = vmatprep.subr.mxu0 0.0
    %399 = vmatpush1.msra.mxu0 0.0
    %400 = vmatprep.subr.mxu0 0.0
    %401 = vmatpush1.msra.mxu0 0.0
    %402 = vmatprep.subr.mxu0 0.0
    %403 = vmatpush1.msra.mxu0 0.0
    %404 = vmatprep.subr.mxu0 0.0
    %405 = vmatpush1.msra.mxu0 0.0
    %406 = vmatprep.subr.mxu0 0.0
    %407 = vmatpush1.msra.mxu0 0.0
    %408 = vmatprep.subr.mxu0 0.0
    %409 = vmatpush1.msra.mxu0 0.0
    %410 = vmatprep.subr.mxu0 0.0
    %411 = vmatpush1.msra.mxu0 0.0
    %412 = vmatprep.subr.mxu0 0.0
    %413 = vmatpush1.msra.mxu0 0.0
    %414 = vmatprep.subr.mxu0 0.0
    %415 = vmatpush1.msra.mxu0 0.0
    %416 = vmatprep.subr.mxu0 0.0
    %417 = vmatpush1.msra.mxu0 0.0
    %418 = vmatprep.subr.mxu0 0.0
    %419 = vmatpush1.msra.mxu0 0.0
    %420 = vmatprep.subr.mxu0 0.0
    %421 = vmatpush1.msra.mxu0 0.0
    %422 = vmatprep.subr.mxu0 0.0
    %423 = vmatpush1.msra.mxu0 0.0
    %424 = vmatprep.subr.mxu0 0.0
    %425 = vmatpush1.msra.mxu0 0.0
    %426 = vmatprep.subr.mxu0 0.0
    %427 = vmatpush1.msra.mxu0 0.0
    %428 = vmatprep.subr.mxu0 0.0
    %429 = vmatpush1.msra.mxu0 0.0
    %430 = vmatprep.mubr.f32.mxu0 0.0
    %431 = vmatmul.mubr.f32.gmra.mrb[0].mxu0 %v360
    %v432 = vpop.f32.mrb[0].mxu0
    %v433 = vadd.f32 0.0, %v432
    %v434 = vpop.f32.mrb[0].mxu0
    %435 = vdwg.mxu0
    %v436 = vsel %vm218, %v233, 0.0
    %v437 = vrot.slane %v436, 4
    %v438 = vadd.f32 %v436, %v437
    %v439 = vrot.slane %v438, 2
    %v440 = vadd.f32 %v438, %v439
    %v441 = vrot.slane %v440, 1
    %v442 = vadd.f32 %v440, %v441
    %444 = vrot.lane.b32.xlu0 %v442, 118
    %v445 = vpop.permute.xlu0 %444
    %v447 = vmul.f32 %v216, %v445
    %449 = vrot.lane.b32.xlu0 %v447, 32
    %v450 = vpop.permute.xlu0 %449
    %v452 = vsel %vm359, %v450, 0.0
    %453 = vadd.xlane.f32.xlu0 %v452
    %v454 = vpop.xlane.xlu0 %453
    %v455 = vrcp.pop %v454
    %v456 = vmul.f32 %v454, %v455
    %v457 = vsub.f32 2.0, %v456
    %v458 = vmul.f32 %v455, %v457
    %v459 = vmul.f32 %v433, %v458
    %v460 = vmul.f32 %v459, 0.5
    %v461 = vmul.f32 %v126, 0.5
    %v462 = vadd.f32 %v460, %v461
    %v463 = vsel %vm50, %v462, 0.0
    %464 = vadd.xlane.f32.xlu0 %v463
    %v465 = vpop.xlane.xlu0 %464
    %v466 = vmul.f32 %v465, %v102
    %v467 = vmul.f32 %v462, %v462
    %v468 = vsel %vm50, %v467, 0.0
    %469 = vadd.xlane.f32.xlu0 %v468
    %v470 = vpop.xlane.xlu0 %469
    %v471 = vmul.f32 %v470, %v102
    %v472 = vmul.f32 %v466, %v466
    %v473 = vsub.f32 %v471, %v472
    %v474 = vmax.f32 %v473, 0.0
    %v475 = vsub.f32 %v462, %v466
    %v476 = vadd.f32 %v474, 1e-05
    %v477 = vrsqrt.pop %v476
    %v478 = vmul.f32 %v475, %v477
    %v479 = vlaneseq
    %v480 = vshrl.u32 %v479, 7
    %v481 = vsub.s32 0, %v480
    %v482 = vrot.slane %v133, %v481
    %v483 = vmul.f32 %v478, %v482
    %v484 = vlaneseq
    %v485 = vshrl.u32 %v484, 7
    %v486 = vsub.s32 0, %v485
    %v487 = vrot.slane %v134, %v486
    %v488 = vadd.f32 %v483, %v487
    %s489 = scalar_lea.vmem [#allocation2], 32
    %v490 = vld [vmem:[%s489] sm:$0xf]
    %v491 = vld [vmem:[%s489 + $0x4] sm:$0xf]
    %v492 = vld [vmem:[%s489 + $0x8] sm:$0xf]
    %v493 = vld [vmem:[%s489 + $0xc] sm:$0xf]
    %v494 = vld [vmem:[%s2 + $0x6] sm:$0x1]
    %v495 = vld [vmem:[%s2 + $0x7] sm:$0x1]
    %v496 = vld [vmem:[%s2 + $0x8] sm:$0x1]
    %v497 = vpack.c.bf16 %v488, %v488
    %v498 = vlaneseq
    %v499 = vshrl.u32 %v498, 7
    %v500 = vsub.s32 0, %v499
    %v501 = vrot.slane %v494, %v500
    %v506 = vunpack.c.l.b16 %v490
    %v507 = vunpack.c.l.b16 %v491
    %v508 = vunpack.c.l.b16 %v492
    %v509 = vunpack.c.l.b16 %v493
    %v510 = vpack.c.b16 %v507, %v506
    %v511 = vpack.c.b16 %v509, %v508
    %v515 = vsel %vm50, %v497, 0
    %517 = vmatprep.subr.bf16.mxu0 0
    %518 = vmatpush1.bf16.msra.mxu0 %v510
    %519 = vmatprep.subr.bf16.mxu0 0
    %520 = vmatpush1.bf16.msra.mxu0 %v511
    %521 = vmatprep.subr.bf16.mxu0 0
    %522 = vmatpush1.bf16.msra.mxu0 0
    %523 = vmatprep.subr.bf16.mxu0 0
    %524 = vmatpush1.bf16.msra.mxu0 0
    %525 = vmatprep.subr.bf16.mxu0 0
    %526 = vmatpush1.bf16.msra.mxu0 0
    %527 = vmatprep.subr.bf16.mxu0 0
    %528 = vmatpush1.bf16.msra.mxu0 0
    %529 = vmatprep.subr.bf16.mxu0 0
    %530 = vmatpush1.bf16.msra.mxu0 0
    %531 = vmatprep.subr.bf16.mxu0 0
    %532 = vmatpush1.bf16.msra.mxu0 0
    %533 = vmatprep.subr.bf16.mxu0 0
    %534 = vmatpush1.bf16.msra.mxu0 0
    %535 = vmatprep.subr.bf16.mxu0 0
    %536 = vmatpush1.bf16.msra.mxu0 0
    %537 = vmatprep.subr.bf16.mxu0 0
    %538 = vmatpush1.bf16.msra.mxu0 0
    %539 = vmatprep.subr.bf16.mxu0 0
    %540 = vmatpush1.bf16.msra.mxu0 0
    %541 = vmatprep.subr.bf16.mxu0 0
    %542 = vmatpush1.bf16.msra.mxu0 0
    %543 = vmatprep.subr.bf16.mxu0 0
    %544 = vmatpush1.bf16.msra.mxu0 0
    %545 = vmatprep.subr.bf16.mxu0 0
    %546 = vmatpush1.bf16.msra.mxu0 0
    %547 = vmatprep.subr.bf16.mxu0 0
    %548 = vmatpush1.bf16.msra.mxu0 0
    %549 = vmatprep.mubr.bf16.mxu0 0
    %550 = vmatmul.mubr.bf16.gmra.mrb[0].mxu0 %v515
    %v551 = vpop.f32.mrb[0].mxu0
    %v552 = vadd.f32 %v501, %v551
    %v553 = vpop.f32.mrb[0].mxu0
    %v554 = vpop.f32.mrb[0].mxu0
    %v555 = vpop.f32.mrb[0].mxu0
    %556 = vdwg.mxu0
    %v557 = vmul.f32 %v552, %v552
    %v558 = vsel %vm50, %v557, 0.0
    %559 = vadd.xlane.f32.xlu0 %v558
    %v560 = vpop.xlane.xlu0 %559
    %v561 = vmul.f32 %v560, 0.5
    %563 = vrot.lane.b32.xlu0 %v557, 96
    %v564 = vpop.permute.xlu0 %563
    %v566 = vsel %vm50, %v564, 0.0
    %567 = vadd.xlane.f32.xlu0 %v566
    %v568 = vpop.xlane.xlu0 %567
    %v569 = vmul.f32 %v568, 0.5
    %v570 = vsub.f32 %v552, %v561
    %v571 = vsel %vm209, %v552, -inf
    %572 = vmax.xlane.f32.xlu0 %v571
    %v573 = vpop.xlane.xlu0 %572
    %v574 = vsub.f32 %v570, %v573
    %v575 = vmul.f32 %v574, 1.442695
    %v576 = vpow.pop %v575
    %v577 = vadd.f32 %v576, 1e-06
    %v578 = vsub.f32 %v552, %v569
    %v579 = vsel %vm218, %v552, -inf
    %580 = vmax.xlane.f32.xlu0 %v579
    %v581 = vpop.xlane.xlu0 %580
    %v582 = vrot.slane %v581, 4
    %v583 = vmax.f32 %v581, %v582
    %v584 = vrot.slane %v583, 2
    %v585 = vmax.f32 %v583, %v584
    %v586 = vrot.slane %v585, 1
    %v587 = vmax.f32 %v585, %v586
    %s588 = vtos %v587
    %v589 = vstv %s588
    %v590 = vsub.f32 %v578, %v589
    %v591 = vmul.f32 %v590, 1.442695
    %v592 = vpow.pop %v591
    %v593 = vadd.f32 %v592, 1e-06
    %595 = vrot.lane.b32.xlu0 %v593, 22
    %v596 = vpop.permute.xlu0 %595
    %598 = vxpose.xlu0.b32.start [1/16] %v596, 128
    %599 = vxpose.xlu0.b32.cont [2/16] 0.0, 128
    %600 = vxpose.xlu0.b32.cont [3/16] 0.0, 128
    %601 = vxpose.xlu0.b32.cont [4/16] 0.0, 128
    %602 = vxpose.xlu0.b32.cont [5/16] 0.0, 128
    %603 = vxpose.xlu0.b32.cont [6/16] 0.0, 128
    %604 = vxpose.xlu0.b32.cont [7/16] 0.0, 128
    %605 = vxpose.xlu0.b32.cont [8/16] 0.0, 128
    %606 = vxpose.xlu0.b32.cont [9/16] 0.0, 128
    %607 = vxpose.xlu0.b32.cont [10/16] 0.0, 128
    %608 = vxpose.xlu0.b32.cont [11/16] 0.0, 128
    %609 = vxpose.xlu0.b32.cont [12/16] 0.0, 128
    %610 = vxpose.xlu0.b32.cont [13/16] 0.0, 128
    %611 = vxpose.xlu0.b32.cont [14/16] 0.0, 128
    %612 = vxpose.xlu0.b32.cont [15/16] 0.0, 128
    %613 = vxpose.xlu0.b32.end [16/16] 0.0, 128
    %v614 = vpop.trf.xlu0
    %v615 = vpop.trf.xlu0
    %v616 = vpop.trf.xlu0
    %v617 = vpop.trf.xlu0
    %v618 = vpop.trf.xlu0
    %v619 = vpop.trf.xlu0
    %v620 = vpop.trf.xlu0
    %v621 = vpop.trf.xlu0
    %v622 = vpop.trf.xlu0
    %v623 = vpop.trf.xlu0
    %v624 = vpop.trf.xlu0
    %v625 = vpop.trf.xlu0
    %v626 = vpop.trf.xlu0
    %v627 = vpop.trf.xlu0
    %v628 = vpop.trf.xlu0
    %v629 = vpop.trf.xlu0
    %631 = vrot.lane.b32.xlu0 %v552, 64
    %v632 = vpop.permute.xlu0 %631
    %v635 = vsel %vm274, %v614, 0
    %v638 = vsel %vm274, %v615, 0
    %640 = vmatprep.subr.mxu0 0.0
    %641 = vmatpush1.msra.mxu0 %v632
    %642 = vmatprep.subr.mxu0 0.0
    %643 = vmatpush1.msra.mxu0 0.0
    %644 = vmatprep.subr.mxu0 0.0
    %645 = vmatpush1.msra.mxu0 0.0
    %646 = vmatprep.subr.mxu0 0.0
    %647 = vmatpush1.msra.mxu0 0.0
    %648 = vmatprep.subr.mxu0 0.0
    %649 = vmatpush1.msra.mxu0 0.0
    %650 = vmatprep.subr.mxu0 0.0
    %651 = vmatpush1.msra.mxu0 0.0
    %652 = vmatprep.subr.mxu0 0.0
    %653 = vmatpush1.msra.mxu0 0.0
    %654 = vmatprep.subr.mxu0 0.0
    %655 = vmatpush1.msra.mxu0 0.0
    %656 = vmatprep.subr.mxu0 0.0
    %657 = vmatpush1.msra.mxu0 0.0
    %658 = vmatprep.subr.mxu0 0.0
    %659 = vmatpush1.msra.mxu0 0.0
    %660 = vmatprep.subr.mxu0 0.0
    %661 = vmatpush1.msra.mxu0 0.0
    %662 = vmatprep.subr.mxu0 0.0
    %663 = vmatpush1.msra.mxu0 0.0
    %664 = vmatprep.subr.mxu0 0.0
    %665 = vmatpush1.msra.mxu0 0.0
    %666 = vmatprep.subr.mxu0 0.0
    %667 = vmatpush1.msra.mxu0 0.0
    %668 = vmatprep.subr.mxu0 0.0
    %669 = vmatpush1.msra.mxu0 0.0
    %670 = vmatprep.subr.mxu0 0.0
    %671 = vmatpush1.msra.mxu0 0.0
    %672 = vmatprep.subr.mxu0 0.0
    %673 = vmatpush1.msra.mxu0 0.0
    %674 = vmatprep.subr.mxu0 0.0
    %675 = vmatpush1.msra.mxu0 0.0
    %676 = vmatprep.subr.mxu0 0.0
    %677 = vmatpush1.msra.mxu0 0.0
    %678 = vmatprep.subr.mxu0 0.0
    %679 = vmatpush1.msra.mxu0 0.0
    %680 = vmatprep.subr.mxu0 0.0
    %681 = vmatpush1.msra.mxu0 0.0
    %682 = vmatprep.subr.mxu0 0.0
    %683 = vmatpush1.msra.mxu0 0.0
    %684 = vmatprep.subr.mxu0 0.0
    %685 = vmatpush1.msra.mxu0 0.0
    %686 = vmatprep.subr.mxu0 0.0
    %687 = vmatpush1.msra.mxu0 0.0
    %688 = vmatprep.subr.mxu0 0.0
    %689 = vmatpush1.msra.mxu0 0.0
    %690 = vmatprep.subr.mxu0 0.0
    %691 = vmatpush1.msra.mxu0 0.0
    %692 = vmatprep.subr.mxu0 0.0
    %693 = vmatpush1.msra.mxu0 0.0
    %694 = vmatprep.subr.mxu0 0.0
    %695 = vmatpush1.msra.mxu0 0.0
    %696 = vmatprep.subr.mxu0 0.0
    %697 = vmatpush1.msra.mxu0 0.0
    %698 = vmatprep.subr.mxu0 0.0
    %699 = vmatpush1.msra.mxu0 0.0
    %700 = vmatprep.subr.mxu0 0.0
    %701 = vmatpush1.msra.mxu0 0.0
    %702 = vmatprep.subr.mxu0 0.0
    %703 = vmatpush1.msra.mxu0 0.0
    %704 = vmatprep.mubr.f32.mxu0 0.0
    %705 = vmatmul.mubr.f32.gmra.mrb[0].mxu0 %v635
    %v706 = vpop.f32.mrb[0].mxu0
    %v707 = vadd.f32 0.0, %v706
    %v708 = vpop.f32.mrb[0].mxu0
    %709 = vmatprep.mubr.f32.mxu0 0.0
    %710 = vmatmul.mubr.f32.gmra.mrb[0].mxu0 %v638
    %v711 = vpop.f32.mrb[0].mxu0
    %v712 = vadd.f32 0.0, %v711
    %v713 = vpop.f32.mrb[0].mxu0
    %714 = vdwg.mxu0
    %716 = vrot.lane.b32.xlu0 %v577, 32
    %v717 = vpop.permute.xlu0 %716
    %v718 = vsel %vm359, %v717, 0
    %v721 = vsel %vm362, %v712, 0
    %723 = vmatprep.subr.mxu0 0.0
    %724 = vmatpush1.msra.mxu0 %v707
    %725 = vmatprep.subr.mxu0 0.0
    %726 = vmatpush1.msra.mxu0 %v721
    %727 = vmatprep.subr.mxu0 0.0
    %728 = vmatpush1.msra.mxu0 0.0
    %729 = vmatprep.subr.mxu0 0.0
    %730 = vmatpush1.msra.mxu0 0.0
    %731 = vmatprep.subr.mxu0 0.0
    %732 = vmatpush1.msra.mxu0 0.0
    %733 = vmatprep.subr.mxu0 0.0
    %734 = vmatpush1.msra.mxu0 0.0
    %735 = vmatprep.subr.mxu0 0.0
    %736 = vmatpush1.msra.mxu0 0.0
    %737 = vmatprep.subr.mxu0 0.0
    %738 = vmatpush1.msra.mxu0 0.0
    %739 = vmatprep.subr.mxu0 0.0
    %740 = vmatpush1.msra.mxu0 0.0
    %741 = vmatprep.subr.mxu0 0.0
    %742 = vmatpush1.msra.mxu0 0.0
    %743 = vmatprep.subr.mxu0 0.0
    %744 = vmatpush1.msra.mxu0 0.0
    %745 = vmatprep.subr.mxu0 0.0
    %746 = vmatpush1.msra.mxu0 0.0
    %747 = vmatprep.subr.mxu0 0.0
    %748 = vmatpush1.msra.mxu0 0.0
    %749 = vmatprep.subr.mxu0 0.0
    %750 = vmatpush1.msra.mxu0 0.0
    %751 = vmatprep.subr.mxu0 0.0
    %752 = vmatpush1.msra.mxu0 0.0
    %753 = vmatprep.subr.mxu0 0.0
    %754 = vmatpush1.msra.mxu0 0.0
    %755 = vmatprep.subr.mxu0 0.0
    %756 = vmatpush1.msra.mxu0 0.0
    %757 = vmatprep.subr.mxu0 0.0
    %758 = vmatpush1.msra.mxu0 0.0
    %759 = vmatprep.subr.mxu0 0.0
    %760 = vmatpush1.msra.mxu0 0.0
    %761 = vmatprep.subr.mxu0 0.0
    %762 = vmatpush1.msra.mxu0 0.0
    %763 = vmatprep.subr.mxu0 0.0
    %764 = vmatpush1.msra.mxu0 0.0
    %765 = vmatprep.subr.mxu0 0.0
    %766 = vmatpush1.msra.mxu0 0.0
    %767 = vmatprep.subr.mxu0 0.0
    %768 = vmatpush1.msra.mxu0 0.0
    %769 = vmatprep.subr.mxu0 0.0
    %770 = vmatpush1.msra.mxu0 0.0
    %771 = vmatprep.subr.mxu0 0.0
    %772 = vmatpush1.msra.mxu0 0.0
    %773 = vmatprep.subr.mxu0 0.0
    %774 = vmatpush1.msra.mxu0 0.0
    %775 = vmatprep.subr.mxu0 0.0
    %776 = vmatpush1.msra.mxu0 0.0
    %777 = vmatprep.subr.mxu0 0.0
    %778 = vmatpush1.msra.mxu0 0.0
    %779 = vmatprep.subr.mxu0 0.0
    %780 = vmatpush1.msra.mxu0 0.0
    %781 = vmatprep.subr.mxu0 0.0
    %782 = vmatpush1.msra.mxu0 0.0
    %783 = vmatprep.subr.mxu0 0.0
    %784 = vmatpush1.msra.mxu0 0.0
    %785 = vmatprep.subr.mxu0 0.0
    %786 = vmatpush1.msra.mxu0 0.0
    %787 = vmatprep.mubr.f32.mxu0 0.0
    %788 = vmatmul.mubr.f32.gmra.mrb[0].mxu0 %v718
    %v789 = vpop.f32.mrb[0].mxu0
    %v790 = vadd.f32 0.0, %v789
    %v791 = vpop.f32.mrb[0].mxu0
    %792 = vdwg.mxu0
    %v793 = vsel %vm218, %v593, 0.0
    %v794 = vrot.slane %v793, 4
    %v795 = vadd.f32 %v793, %v794
    %v796 = vrot.slane %v795, 2
    %v797 = vadd.f32 %v795, %v796
    %v798 = vrot.slane %v797, 1
    %v799 = vadd.f32 %v797, %v798
    %801 = vrot.lane.b32.xlu0 %v799, 118
    %v802 = vpop.permute.xlu0 %801
    %v804 = vmul.f32 %v577, %v802
    %806 = vrot.lane.b32.xlu0 %v804, 32
    %v807 = vpop.permute.xlu0 %806
    %v809 = vsel %vm359, %v807, 0.0
    %810 = vadd.xlane.f32.xlu0 %v809
    %v811 = vpop.xlane.xlu0 %810
    %v812 = vrcp.pop %v811
    %v813 = vmul.f32 %v811, %v812
    %v814 = vsub.f32 2.0, %v813
    %v815 = vmul.f32 %v812, %v814
    %v816 = vmul.f32 %v790, %v815
    %v817 = vmul.f32 %v816, 0.5
    %v818 = vmul.f32 %v488, 0.5
    %v819 = vadd.f32 %v817, %v818
    %v820 = vsel %vm50, %v819, 0.0
    %821 = vadd.xlane.f32.xlu0 %v820
    %v822 = vpop.xlane.xlu0 %821
    %v823 = vmul.f32 %v822, %v102
    %v824 = vmul.f32 %v819, %v819
    %v825 = vsel %vm50, %v824, 0.0
    %826 = vadd.xlane.f32.xlu0 %v825
    %v827 = vpop.xlane.xlu0 %826
    %v828 = vmul.f32 %v827, %v102
    %v829 = vmul.f32 %v823, %v823
    %v830 = vsub.f32 %v828, %v829
    %v831 = vmax.f32 %v830, 0.0
    %v832 = vsub.f32 %v819, %v823
    %v833 = vadd.f32 %v831, 1e-05
    %v834 = vrsqrt.pop %v833
    %v835 = vmul.f32 %v832, %v834
    %v836 = vlaneseq
    %v837 = vshrl.u32 %v836, 7
    %v838 = vsub.s32 0, %v837
    %v839 = vrot.slane %v495, %v838
    %v840 = vmul.f32 %v835, %v839
    %v841 = vlaneseq
    %v842 = vshrl.u32 %v841, 7
    %v843 = vsub.s32 0, %v842
    %v844 = vrot.slane %v496, %v843
    %v845 = vadd.f32 %v840, %v844
    %846 = vst.msk [vmem:[#allocation5] sm:$0xff] %vm50, %v845
    // Predicated region
    $region18: #{transconv_forward.1} parent=1 // pred_check
      _
    $region19: #{transconv_forward.1} parent=1 // pred_check_branch
      %848 = sbr.rel (0) target = $region21
    $region20: #{transconv_forward.1} parent=1 // pred_region
      %s850 = ssub.s32 128, 128
      %851 = vsyncadd [#allocation4], %s850
      %s853 = sshll.u32 [#allocation5], 4
      %s854 = int_to_ptr.vmem [resolvable:$true] %s853
      %856 = dma.vmem_to_hbm [thread:$0]  %s854, 128, %s3, [#allocation4]
    $region21: #{transconv_forward.1} parent=1 // pred_fallthru
      _
    // Predicated region
    $region22: #{transconv_forward.1} parent=1 // pred_check
      _
    $region23: #{transconv_forward.1} parent=1 // pred_check_branch
      %858 = sbr.rel (0) target = $region25
    $region24: #{transconv_forward.1} parent=1 // pred_region
      %859 = dma.done [#allocation4], 128
    $region25: #{transconv_forward.1} parent=1 // pred_fallthru
      _
    %860 = vsyncpa [#allocation3], 1
    %861 = vsyncpa [#allocation4], 1

</llo_original>
